<compile_context>
chip_gen: v6e
topology: v6e:2x2x1
jax: 0.10.0
libtpu: 0.0.40
codegen_flags: <defaults>
</compile_context>

<pallas_src>
import functools

import jax
import jax.numpy as jnp
from jax.experimental import pallas as pl
from jax.experimental.pallas import tpu as pltpu


def _round_up(x: int, m: int) -> int:
    return ((x + m - 1) // m) * m


def _head_kernel(x_ref, w_ref, b_ref, o_ref):
    # x_ref: (tb, F)        activations
    # w_ref: (tc, F)        weight tile in PyTorch [classes, features] layout
    # b_ref: (1,  tc)       bias tile (f32)
    # o_ref: (tb, tc)       logits tile
    # Contract the feature (last) dims of both operands on the MXU; accumulate f32.
    y = jax.lax.dot_general(
        x_ref[...],
        w_ref[...],
        dimension_numbers=(((1,), (1,)), ((), ())),
        preferred_element_type=jnp.float32,
    )
    o_ref[...] = (y + b_ref[...].astype(jnp.float32)).astype(o_ref.dtype)


def _choose_tiles(B: int, C: int, F: int, w_itemsize: int):
    """Pick (tb, tc) tiles: lane-dense classes, VMEM-safe weight tiles."""
    # Weight tile budget ~4 MiB per buffer (x2 for double-buffering = 8 MiB),
    # comfortably under the 32 MiB scoped-VMEM default on v5e/v6e/v7x.
    budget_bytes = 4 * 1024 * 1024
    tc_max = max(128, (budget_bytes // max(1, F * w_itemsize)) // 128 * 128)
    tc = min(tc_max, _round_up(C, 128))
    # Batch tile: multiple of 8 sublanes, capped so x/out tiles stay small.
    tb = min(_round_up(max(B, 1), 8), 256)
    return tb, tc


def head_forward(x, weight, bias, drop_rate: float = 0.0, training: bool = False):
    """Forward pass of Head (use_arcface=False).

    x:      (B, num_features)
    weight: (num_classes, num_features)   -- PyTorch nn.Linear layout (NOT transposed)
    bias:   (num_classes,)
    Returns (logits (B, num_classes), None), matching the PyTorch module.
    """
    if training and drop_rate > 0.0:
        # TODO(synk): training-mode dropout with in-kernel PRNG not implemented.
        raise NotImplementedError("Head: training-mode dropout not implemented")

    B, F = x.shape
    C, Fw = weight.shape
    assert Fw == F, "weight feature dim must match x"

    tb, tc = _choose_tiles(B, C, F, jnp.dtype(weight.dtype).itemsize)

    # Pad to tile multiples (lane-dense output, no partial/masked stores).
    # In production the weight/bias padding would be done once at load time.
    Bp = _round_up(B, tb)
    Cp = _round_up(C, tc)

    x_p = x if Bp == B else jnp.pad(x, ((0, Bp - B), (0, 0)))
    w_p = weight if Cp == C else jnp.pad(weight, ((0, Cp - C), (0, 0)))
    b_p = bias if Cp == C else jnp.pad(bias, (0, Cp - C))
    b_p = b_p.astype(jnp.float32).reshape(1, Cp)

    grid = (Bp // tb, Cp // tc)

    cost = pl.CostEstimate(
        flops=2 * Bp * F * Cp,
        transcendentals=0,
        bytes_accessed=(x_p.size * x_p.dtype.itemsize
                        + w_p.size * w_p.dtype.itemsize
                        + b_p.size * b_p.dtype.itemsize
                        + Bp * Cp * x.dtype.itemsize),
    )

    out = pl.pallas_call(
        _head_kernel,
        out_shape=jax.ShapeDtypeStruct((Bp, Cp), x.dtype),
        grid=grid,
        in_specs=[
            pl.BlockSpec((tb, F), lambda i, j: (i, 0)),   # activations
            pl.BlockSpec((tc, F), lambda i, j: (j, 0)),   # weight [C, F] tiles
            pl.BlockSpec((1, tc), lambda i, j: (0, j)),   # bias
        ],
        out_specs=pl.BlockSpec((tb, tc), lambda i, j: (i, j)),
        compiler_params=pltpu.CompilerParams(
            dimension_semantics=("parallel", "parallel"),
        ),
        cost_estimate=cost,
    )(x_p, w_p, b_p)

    return out[:B, :C], None


if __name__ == "__main__":
    # Small, deterministic shapes consistent with the module:
    # Head(num_features=32, num_classes=16, use_arcface=False, drop_rate=0.1)
    B, num_features, num_classes = 8, 32, 16

    key = jax.random.PRNGKey(0)
    kx, kw, kb = jax.random.split(key, 3)

    x = jax.random.normal(kx, (B, num_features), dtype=jnp.float32)

    # Deterministic parameter init (PyTorch nn.Linear-style uniform bound).
    bound = 1.0 / (num_features ** 0.5)
    weight = jax.random.uniform(
        kw, (num_classes, num_features), minval=-bound, maxval=bound, dtype=jnp.float32
    )
    bias = jax.random.uniform(
        kb, (num_classes,), minval=-bound, maxval=bound, dtype=jnp.float32
    )

    fwd = jax.jit(functools.partial(head_forward, drop_rate=0.1, training=False))

    # f32 path — strict check against plain-JAX reference.
    logits, loss = fwd(x, weight, bias)
    logits = jax.block_until_ready(logits)
    ref = x @ weight.T + bias
    assert loss is None
    assert logits.shape == (B, num_classes)
    assert jnp.allclose(logits, ref, atol=1e-5, rtol=1e-5), "f32 mismatch vs reference"

    # bf16 weights/activations path (bandwidth-bound production mode) — f32 MXU
    # accumulation keeps accuracy; loose tolerance vs the f32 reference.
    logits_bf16, _ = fwd(x.astype(jnp.bfloat16), weight.astype(jnp.bfloat16), bias)
    logits_bf16 = jax.block_until_ready(logits_bf16)
    assert jnp.allclose(
        logits_bf16.astype(jnp.float32), ref, atol=1e-1, rtol=1e-1
    ), "bf16 path mismatch vs reference"

    print("KERNEL_OK")
</pallas_src>

<mosaic_0001>
module attributes {stable_mosaic.version = 11 : i64} {
  func.func @_head_kernel(%arg0: i32, %arg1: i32, %arg2: memref<8x32xf32, #tpu.memory_space<vmem>>, %arg3: memref<128x32xf32, #tpu.memory_space<vmem>>, %arg4: memref<1x128xf32, #tpu.memory_space<vmem>>, %arg5: memref<8x128xf32, #tpu.memory_space<vmem>>) attributes {dimension_semantics = [#tpu.dimension_semantics<parallel>, #tpu.dimension_semantics<parallel>], iteration_bounds = array<i64: 1, 1>, scalar_prefetch = 0 : i64, scratch_operands = 0 : i64, tpu.core_type = #tpu.core_type<tc>, window_params = [{transform_indices = @transform_0, window_bounds = array<i64: 8, 32>}, {transform_indices = @transform_1, window_bounds = array<i64: 128, 32>}, {transform_indices = @transform_2, window_bounds = array<i64: 1, 128>}, {transform_indices = @transform_3, window_bounds = array<i64: 8, 128>}]} {
    %c0 = arith.constant 0 : index
    %c0_0 = arith.constant 0 : index
    %0 = vector.load %arg2[%c0, %c0_0] : memref<8x32xf32, #tpu.memory_space<vmem>>, vector<8x32xf32>
    %c0_1 = arith.constant 0 : index
    %c0_2 = arith.constant 0 : index
    %1 = vector.load %arg3[%c0_1, %c0_2] : memref<128x32xf32, #tpu.memory_space<vmem>>, vector<128x32xf32>
    %cst = arith.constant dense<0.000000e+00> : vector<8x128xf32>
    %2 = tpu.matmul %0, %1, %cst {dimension_numbers = #tpu.dot_dimension_numbers<[1], [1], [0], [0], [0, 0, 1, 0], [], []>} : vector<8x32xf32>, vector<128x32xf32>, vector<8x128xf32> -> vector<8x128xf32>
    %c0_3 = arith.constant 0 : index
    %c0_4 = arith.constant 0 : index
    %3 = vector.load %arg4[%c0_3, %c0_4] : memref<1x128xf32, #tpu.memory_space<vmem>>, vector<1x128xf32>
    %4 = vector.broadcast %3 : vector<1x128xf32> to vector<8x128xf32>
    %5 = arith.addf %2, %4 : vector<8x128xf32>
    %c0_5 = arith.constant 0 : index
    %c0_6 = arith.constant 0 : index
    %6 = vector.load %arg5[%c0_5, %c0_6] : memref<8x128xf32, #tpu.memory_space<vmem>>, vector<8x128xf32>
    tpu.vector_store %arg5[%c0_5, %c0_6], %5 {strides = array<i32>} : memref<8x128xf32, #tpu.memory_space<vmem>>, vector<8x128xf32>,
    return
  }
  func.func @transform_0(%arg0: i32, %arg1: i32) -> (i32, i32) {
    %c0_i32 = arith.constant 0 : i32
    %c0_i32_0 = arith.constant 0 : i32
    return %arg0, %c0_i32 : i32, i32
  }
  func.func @transform_1(%arg0: i32, %arg1: i32) -> (i32, i32) {
    %c0_i32 = arith.constant 0 : i32
    %c0_i32_0 = arith.constant 0 : i32
    return %arg1, %c0_i32 : i32, i32
  }
  func.func @transform_2(%arg0: i32, %arg1: i32) -> (i32, i32) {
    %c0_i32 = arith.constant 0 : i32
    %c0_i32_0 = arith.constant 0 : i32
    return %c0_i32, %arg1 : i32, i32
  }
  func.func @transform_3(%arg0: i32, %arg1: i32) -> (i32, i32) {
    %c0_i32 = arith.constant 0 : i32
    return %arg0, %arg1 : i32, i32
  }
}

</mosaic_0001>

<llo_original>
// kernel: head_forward.1
$region0: #{head_forward.1}
  #allocation0 [shape = 'u32[]', space=smem, size = 0x4, offset = 0x4, fixed_abs, tag = 'smem constant byte address 0x4 - core index']
  #allocation1 [shape = 'u32[144,128]{1,0:T(1,128)}', space=vmem, size = 0x12000, scoped, tag = 'internal scratch']
  %s0 = inlined_call_operand.vmem [shape: f32[8,32], index: 0, kind: input, shape index: {}]
  %s1 = inlined_call_operand.vmem [shape: f32[128,32], index: 1, kind: input, shape index: {}]
  %s2 = inlined_call_operand.vmem [shape: f32[1,128], index: 2, kind: input, shape index: {}]
  %s3 = inlined_call_operand.hbm [shape: f32[8,128], index: 3, kind: output, shape index: {}]
  %s4 = sld [smem:[#allocation0]]
  $region22: #{head_forward.1} parent=0
    _
  %s6 = ssub.s32 1, %s4
  %s7 = scalar_select 0, %s6, %s4
  $region1: #{head_forward.1} parent=0
    #allocation2 [shape = 'u8[4096]{0}', space=vmem, size = 0x1000, scoped, tag = 'output window, operand 0, single buffered']
    #allocation3 [shape = 's32[1]{0}', space=sflag, size = 0x4, scoped, tag = 'scoped memory for head_forward.1']
    %8 = vsyncpa [#allocation3], 0
    // Predicated region
    $region2: #{head_forward.1} parent=1 // pred_check
      _
    $region3: #{head_forward.1} parent=1 // pred_check_branch
      %10 = sbr.rel (0) target = $region5
    $region4: #{head_forward.1} parent=1 // pred_region
      _
    $region5: #{head_forward.1} parent=1 // pred_fallthru
      _
    // Predicated region
    $region6: #{head_forward.1} parent=1 // pred_check
      _
    $region7: #{head_forward.1} parent=1 // pred_check_branch
      %12 = sbr.rel (0) target = $region9
    $region8: #{head_forward.1} parent=1 // pred_region
      _
    $region9: #{head_forward.1} parent=1 // pred_fallthru
      _
    // Predicated region
    $region10: #{head_forward.1} parent=1 // pred_check
      _
    $region11: #{head_forward.1} parent=1 // pred_check_branch
      %14 = sbr.rel (0) target = $region13
    $region12: #{head_forward.1} parent=1 // pred_region
      _
    $region13: #{head_forward.1} parent=1 // pred_fallthru
      _
    %v15 = vld [vmem:[%s0] sm:$0xff]
    %v16 = vld [vmem:[%s1] sm:$0xff]
    %v17 = vld [vmem:[%s1 + $0x8] sm:$0xff]
    %v18 = vld [vmem:[%s1 + $0x10] sm:$0xff]
    %v19 = vld [vmem:[%s1 + $0x18] sm:$0xff]
    %v20 = vld [vmem:[%s1 + $0x20] sm:$0xff]
    %v21 = vld [vmem:[%s1 + $0x28] sm:$0xff]
    %v22 = vld [vmem:[%s1 + $0x30] sm:$0xff]
    %v23 = vld [vmem:[%s1 + $0x38] sm:$0xff]
    %v24 = vld [vmem:[%s1 + $0x40] sm:$0xff]
    %v25 = vld [vmem:[%s1 + $0x48] sm:$0xff]
    %v26 = vld [vmem:[%s1 + $0x50] sm:$0xff]
    %v27 = vld [vmem:[%s1 + $0x58] sm:$0xff]
    %v28 = vld [vmem:[%s1 + $0x60] sm:$0xff]
    %v29 = vld [vmem:[%s1 + $0x68] sm:$0xff]
    %v30 = vld [vmem:[%s1 + $0x70] sm:$0xff]
    %v31 = vld [vmem:[%s1 + $0x78] sm:$0xff]
    %v32 = vld [vmem:[%s2] sm:$0x1]
    %v34 = vlaneseq
    %v35 = vshrl.u32 %v34, 7
    %v36 = vsub.s32 0, %v35
    %v37 = vrot.slane %v32, %v36
    %vm39 = vcmask 261120
    %v41 = vsel %vm39, %v15, 0
    %v44 = vsel %vm39, %v16, 0
    %v47 = vsel %vm39, %v17, 0
    %v50 = vsel %vm39, %v18, 0
    %v53 = vsel %vm39, %v19, 0
    %v56 = vsel %vm39, %v20, 0
    %v59 = vsel %vm39, %v21, 0
    %v62 = vsel %vm39, %v22, 0
    %v65 = vsel %vm39, %v23, 0
    %v68 = vsel %vm39, %v24, 0
    %v71 = vsel %vm39, %v25, 0
    %v74 = vsel %vm39, %v26, 0
    %v77 = vsel %vm39, %v27, 0
    %v80 = vsel %vm39, %v28, 0
    %v83 = vsel %vm39, %v29, 0
    %v86 = vsel %vm39, %v30, 0
    %v89 = vsel %vm39, %v31, 0
    %91 = vmatprep.subr.mxu0 0.0
    %92 = vmatpush1.xpose.msra.mxu0 %v89
    %93 = vmatprep.subr.mxu0 0.0
    %94 = vmatpush1.xpose.msra.mxu0 %v86
    %95 = vmatprep.subr.mxu0 0.0
    %96 = vmatpush1.xpose.msra.mxu0 %v83
    %97 = vmatprep.subr.mxu0 0.0
    %98 = vmatpush1.xpose.msra.mxu0 %v80
    %99 = vmatprep.subr.mxu0 0.0
    %100 = vmatpush1.xpose.msra.mxu0 %v77
    %101 = vmatprep.subr.mxu0 0.0
    %102 = vmatpush1.xpose.msra.mxu0 %v74
    %103 = vmatprep.subr.mxu0 0.0
    %104 = vmatpush1.xpose.msra.mxu0 %v71
    %105 = vmatprep.subr.mxu0 0.0
    %106 = vmatpush1.xpose.msra.mxu0 %v68
    %107 = vmatprep.subr.mxu0 0.0
    %108 = vmatpush1.xpose.msra.mxu0 %v65
    %109 = vmatprep.subr.mxu0 0.0
    %110 = vmatpush1.xpose.msra.mxu0 %v62
    %111 = vmatprep.subr.mxu0 0.0
    %112 = vmatpush1.xpose.msra.mxu0 %v59
    %113 = vmatprep.subr.mxu0 0.0
    %114 = vmatpush1.xpose.msra.mxu0 %v56
    %115 = vmatprep.subr.mxu0 0.0
    %116 = vmatpush1.xpose.msra.mxu0 %v53
    %117 = vmatprep.subr.mxu0 0.0
    %118 = vmatpush1.xpose.msra.mxu0 %v50
    %119 = vmatprep.subr.mxu0 0.0
    %120 = vmatpush1.xpose.msra.mxu0 %v47
    %121 = vmatprep.subr.mxu0 0.0
    %122 = vmatpush1.xpose.msra.mxu0 %v44
    %123 = vmatprep.subr.mxu0 0.0
    %124 = vmatpush2.xpose.msra.mxu0 0.0
    %125 = vmatprep.subr.mxu0 0.0
    %126 = vmatpush2.xpose.msra.mxu0 0.0
    %127 = vmatprep.subr.mxu0 0.0
    %128 = vmatpush2.xpose.msra.mxu0 0.0
    %129 = vmatprep.subr.mxu0 0.0
    %130 = vmatpush2.xpose.msra.mxu0 0.0
    %131 = vmatprep.subr.mxu0 0.0
    %132 = vmatpush2.xpose.msra.mxu0 0.0
    %133 = vmatprep.subr.mxu0 0.0
    %134 = vmatpush2.xpose.msra.mxu0 0.0
    %135 = vmatprep.subr.mxu0 0.0
    %136 = vmatpush2.xpose.msra.mxu0 0.0
    %137 = vmatprep.subr.mxu0 0.0
    %138 = vmatpush2.xpose.msra.mxu0 0.0
    %139 = vmatprep.subr.mxu0 0.0
    %140 = vmatpush2.xpose.msra.mxu0 0.0
    %141 = vmatprep.subr.mxu0 0.0
    %142 = vmatpush2.xpose.msra.mxu0 0.0
    %143 = vmatprep.subr.mxu0 0.0
    %144 = vmatpush2.xpose.msra.mxu0 0.0
    %145 = vmatprep.subr.mxu0 0.0
    %146 = vmatpush2.xpose.msra.mxu0 0.0
    %147 = vmatprep.subr.mxu0 0.0
    %148 = vmatpush2.xpose.msra.mxu0 0.0
    %149 = vmatprep.subr.mxu0 0.0
    %150 = vmatpush2.xpose.msra.mxu0 0.0
    %151 = vmatprep.subr.mxu0 0.0
    %152 = vmatpush2.xpose.msra.mxu0 0.0
    %153 = vmatprep.subr.mxu0 0.0
    %154 = vmatpush2.xpose.msra.mxu0 0.0
    %155 = vmatprep.mubr.f32.mxu0 0.0
    %156 = vmatmul.mubr.f32.gmra.mxu0 %v41
    %v157 = vpop.f32.mrf.mxu0
    %v158 = vadd.f32 %v37, %v157
    %v159 = vpop.f32.mrf.mxu0
    %160 = vdwg.mxu0
    %161 = vst [vmem:[#allocation2] sm:$0xff] %v158
    // Predicated region
    $region14: #{head_forward.1} parent=1 // pred_check
      _
    $region15: #{head_forward.1} parent=1 // pred_check_branch
      %163 = sbr.rel (0) target = $region17
    $region16: #{head_forward.1} parent=1 // pred_region
      %s165 = ssub.s32 128, 128
      %166 = vsyncadd [#allocation3], %s165
      %s168 = sshll.u32 [#allocation2], 4
      %s169 = int_to_ptr.vmem [resolvable:$true] %s168
      %171 = dma.vmem_to_hbm [thread:$0]  %s169, 128, %s3, [#allocation3]
    $region17: #{head_forward.1} parent=1 // pred_fallthru
      _
    // Predicated region
    $region18: #{head_forward.1} parent=1 // pred_check
      _
    $region19: #{head_forward.1} parent=1 // pred_check_branch
      %173 = sbr.rel (0) target = $region21
    $region20: #{head_forward.1} parent=1 // pred_region
      %174 = dma.done [#allocation3], 128
    $region21: #{head_forward.1} parent=1 // pred_fallthru
      _
    %175 = vsyncpa [#allocation3], 1

</llo_original>
